<compile_context>
chip_gen: v6e
topology: v6e:2x2x1
jax: 0.10.0
libtpu: 0.0.40
codegen_flags: <defaults>
</compile_context>

<pallas_src>
import jax
import jax.numpy as jnp
from jax import lax
from jax.experimental import pallas as pl
from jax.experimental.pallas import tpu as pltpu


def _tuned_lens_kernel(x_ref, w_ref, b_ref, o_ref):
    # x_ref: (tm, d)   activation row tile                 (x.dtype)
    # w_ref: (tn, d)   row slice of W in native [out, in]  (x.dtype)
    # b_ref: (1, tn)   bias slice                          (float32)
    # o_ref: (tm, tn)  output tile                         (x.dtype)
    acc = lax.dot_general(
        x_ref[...], w_ref[...],
        dimension_numbers=(((1,), (1,)), ((), ())),  # x @ W^T, no materialized W^T
        preferred_element_type=jnp.float32)
    o_ref[...] = (acc + b_ref[...]).astype(o_ref.dtype)


def _cdiv(a, b):
    return -(-a // b)


def _round_up(x, m):
    return _cdiv(x, m) * m


def _tn_candidates(d, requested):
    cands = []
    for c in (requested, 2048, 1024, 512, 256, 128):
        if c <= d and d % c == 0 and c % 128 == 0 and c not in cands:
            cands.append(c)
    if not cands:
        cands = [d]          # no lane-aligned divisor: use the full dimension
    return cands


def _balanced_tm(M, tm_req):
    """Balanced row tiles: padding bounded to <8 rows per tile."""
    n_tiles = max(1, _cdiv(M, max(tm_req, 8)))
    return _round_up(_cdiv(M, n_tiles), 8), n_tiles


def _working_set(tm, tn, d, itemsize):
    # double-buffered x tile, W slice, bias slice, output tile
    return 2 * (tm * d * itemsize + tn * d * itemsize + tn * 4 + tm * tn * itemsize)


def tuned_lens_transform(x, weight, bias, *, tm=512, tn=1024,
                         vmem_headroom=16 << 20):
    """Apply the tuned-lens translator: x @ weight.T + bias.

    x:      [..., d_model]
    weight: [d_model, d_model]   (PyTorch nn.Linear convention: [out, in])
    bias:   [d_model]
    """
    orig_shape = x.shape
    d = orig_shape[-1]
    x2d = x.reshape(-1, d)
    M = x2d.shape[0]
    itemsize = jnp.dtype(x.dtype).itemsize

    # ---- VMEM budget -------------------------------------------------------
    try:
        vmem_cap = int(pltpu.get_tpu_info().vmem_capacity_bytes)
    except Exception:
        vmem_cap = 64 << 20                      # conservative (v7x per-TC)
    budget = max(vmem_cap - (8 << 20) - vmem_headroom, 16 << 20)

    # ---- tile selection (shrink tn first, then tm, until it fits VMEM) -----
    tn_cands = _tn_candidates(d, tn)
    tm_cands = []
    t = max(tm, 64)
    while t >= 64:
        c = _round_up(t, 8)
        if c not in tm_cands:
            tm_cands.append(c)
        t //= 2

    tm_eff, n_row_tiles = _balanced_tm(M, tm_cands[-1])
    tn_eff = tn_cands[-1]
    found = False
    for tm_c in tm_cands:
        tm_try, n_try = _balanced_tm(M, tm_c)
        for tn_c in tn_cands:
            if _working_set(tm_try, tn_c, d, itemsize) <= budget:
                tm_eff, n_row_tiles, tn_eff = tm_try, n_try, tn_c
                found = True
                break
        if found:
            break
    # (if nothing fits, fall through with the smallest tiles and let the
    #  compiler try -- this only happens for infeasibly large d_model)

    # v7x has 2 TensorCores: if the grid would be a single tile, halve tn
    # (keeping it a lane-aligned divisor of d) to expose >= 2 parallel tiles.
    while (d // tn_eff) * n_row_tiles < 2 and tn_eff % 256 == 0:
        tn_eff //= 2

    M_pad = tm_eff * n_row_tiles
    if M_pad != M:
        x2d = jnp.pad(x2d, ((0, M_pad - M), (0, 0)))

    # Module semantics: translator.to(x.dtype) -> the matmul runs in x.dtype
    # (intentional precision drop when weight is f32 and x is bf16).
    w = weight if weight.dtype == x.dtype else weight.astype(x.dtype)
    b2d = bias.reshape(1, d).astype(jnp.float32)        # bias add stays f32

    num_j = d // tn_eff
    grid = (num_j, n_row_tiles)          # inner (fastest) axis = row tiles

    ws = _working_set(tm_eff, tn_eff, d, itemsize)
    vmem_limit = max(ws, min(ws + vmem_headroom, vmem_cap - (8 << 20)))
    vmem_limit = int(max(vmem_limit, 32 << 20))

    cost = pl.CostEstimate(
        flops=2 * M_pad * d * d,
        transcendentals=0,
        bytes_accessed=(num_j * M_pad * d * itemsize        # x streamed per j
                        + d * d * itemsize                   # weight once
                        + d * 4                              # bias
                        + M_pad * d * itemsize))             # output

    out = pl.pallas_call(
        _tuned_lens_kernel,
        out_shape=jax.ShapeDtypeStruct((M_pad, d), x.dtype),
        grid_spec=pltpu.PrefetchScalarGridSpec(
            num_scalar_prefetch=0,
            grid=grid,
            in_specs=[
                # x row tile: changes every inner step (streamed)
                pl.BlockSpec((tm_eff, d), lambda j, i: (i, 0)),
                # weight row-slice (native [out, in]): constant along the
                # inner axis -> stays resident, DMA skipped per inner step
                pl.BlockSpec((tn_eff, d), lambda j, i: (j, 0)),
                # bias slice (float32)
                pl.BlockSpec((1, tn_eff), lambda j, i: (0, j)),
            ],
            out_specs=pl.BlockSpec((tm_eff, tn_eff), lambda j, i: (i, j)),
        ),
        compiler_params=pltpu.CompilerParams(
            dimension_semantics=("parallel", "parallel"),
            vmem_limit_bytes=vmem_limit,
        ),
        cost_estimate=cost,
    )(x2d, w, b2d)

    if M_pad != M:
        out = out[:M]
    return out.reshape(orig_shape)


if __name__ == "__main__":
    # Small shapes consistent with the module: batch=2, seq=8, d_model=32.
    batch, seq, d_model = 2, 8, 32
    key = jax.random.PRNGKey(0)
    x = jax.random.normal(key, (batch, seq, d_model), dtype=jnp.float32)

    # Parameters mirroring the module's __init__:
    #   nn.init.eye_(translator.weight); translator.bias.zero_()
    weight = jnp.eye(d_model, dtype=jnp.float32)
    bias = jnp.zeros((d_model,), dtype=jnp.float32)

    y = tuned_lens_transform(x, weight, bias)
    y = jax.block_until_ready(y)
    ref = x @ weight.T + bias
    assert y.shape == x.shape
    assert jnp.allclose(y, ref, atol=1e-5, rtol=1e-5)

    # Extra sanity check with a non-trivial weight/bias (validates the
    # trans-B contraction and the bias add, not just the identity path).
    kw, kb = jax.random.split(jax.random.PRNGKey(1))
    weight2 = jax.random.normal(kw, (d_model, d_model), dtype=jnp.float32) * 0.05
    bias2 = jax.random.normal(kb, (d_model,), dtype=jnp.float32) * 0.1
    y2 = jax.block_until_ready(tuned_lens_transform(x, weight2, bias2))
    ref2 = x @ weight2.T + bias2
    assert jnp.allclose(y2, ref2, atol=1e-4, rtol=1e-4)

    print("KERNEL_OK")
</pallas_src>

<mosaic_0001>
module attributes {stable_mosaic.version = 11 : i64} {
  func.func @_tuned_lens_kernel(%arg0: i32, %arg1: i32, %arg2: memref<16x32xf32, #tpu.memory_space<vmem>>, %arg3: memref<32x32xf32, #tpu.memory_space<vmem>>, %arg4: memref<1x32xf32, #tpu.memory_space<vmem>>, %arg5: memref<16x32xf32, #tpu.memory_space<vmem>>) attributes {dimension_semantics = [#tpu.dimension_semantics<parallel>, #tpu.dimension_semantics<parallel>], iteration_bounds = array<i64: 1, 1>, scalar_prefetch = 0 : i64, scratch_operands = 0 : i64, tpu.core_type = #tpu.core_type<tc>, window_params = [{transform_indices = @transform_0, window_bounds = array<i64: 16, 32>}, {transform_indices = @transform_1, window_bounds = array<i64: 32, 32>}, {transform_indices = @transform_2, window_bounds = array<i64: 1, 32>}, {transform_indices = @transform_3, window_bounds = array<i64: 16, 32>}]} {
    %c0 = arith.constant 0 : index
    %c0_0 = arith.constant 0 : index
    %0 = vector.load %arg2[%c0, %c0_0] : memref<16x32xf32, #tpu.memory_space<vmem>>, vector<16x32xf32>
    %c0_1 = arith.constant 0 : index
    %c0_2 = arith.constant 0 : index
    %1 = vector.load %arg3[%c0_1, %c0_2] : memref<32x32xf32, #tpu.memory_space<vmem>>, vector<32x32xf32>
    %cst = arith.constant dense<0.000000e+00> : vector<16x32xf32>
    %2 = tpu.matmul %0, %1, %cst {dimension_numbers = #tpu.dot_dimension_numbers<[1], [1], [0], [0], [0, 0, 1, 0], [], []>} : vector<16x32xf32>, vector<32x32xf32>, vector<16x32xf32> -> vector<16x32xf32>
    %c0_3 = arith.constant 0 : index
    %c0_4 = arith.constant 0 : index
    %3 = vector.load %arg4[%c0_3, %c0_4] : memref<1x32xf32, #tpu.memory_space<vmem>>, vector<1x32xf32>
    %4 = vector.broadcast %3 : vector<1x32xf32> to vector<16x32xf32>
    %5 = arith.addf %2, %4 : vector<16x32xf32>
    %c0_5 = arith.constant 0 : index
    %c0_6 = arith.constant 0 : index
    %6 = vector.load %arg5[%c0_5, %c0_6] : memref<16x32xf32, #tpu.memory_space<vmem>>, vector<16x32xf32>
    tpu.vector_store %arg5[%c0_5, %c0_6], %5 {strides = array<i32>} : memref<16x32xf32, #tpu.memory_space<vmem>>, vector<16x32xf32>,
    return
  }
  func.func @transform_0(%arg0: i32, %arg1: i32) -> (i32, i32) {
    %c0_i32 = arith.constant 0 : i32
    %c0_i32_0 = arith.constant 0 : i32
    return %arg1, %c0_i32 : i32, i32
  }
  func.func @transform_1(%arg0: i32, %arg1: i32) -> (i32, i32) {
    %c0_i32 = arith.constant 0 : i32
    %c0_i32_0 = arith.constant 0 : i32
    return %arg0, %c0_i32 : i32, i32
  }
  func.func @transform_2(%arg0: i32, %arg1: i32) -> (i32, i32) {
    %c0_i32 = arith.constant 0 : i32
    %c0_i32_0 = arith.constant 0 : i32
    return %c0_i32, %arg0 : i32, i32
  }
  func.func @transform_3(%arg0: i32, %arg1: i32) -> (i32, i32) {
    %c0_i32 = arith.constant 0 : i32
    return %arg1, %arg0 : i32, i32
  }
}

</mosaic_0001>

<llo_original>
// kernel: tpu_custom_call.1
$region0: #{tpu_custom_call.1}
  #allocation0 [shape = 'u32[]', space=smem, size = 0x4, offset = 0x4, fixed_abs, tag = 'smem constant byte address 0x4 - core index']
  #allocation1 [shape = 'u32[144,128]{1,0:T(1,128)}', space=vmem, size = 0x12000, scoped, tag = 'internal scratch']
  %s0 = inlined_call_operand.hbm [shape: f32[16,32], index: 0, kind: input, shape index: {}]
  %s1 = inlined_call_operand.hbm [shape: f32[32,32], index: 1, kind: input, shape index: {}]
  %s2 = inlined_call_operand.vmem [shape: f32[1,32], index: 2, kind: input, shape index: {}]
  %s3 = inlined_call_operand.hbm [shape: f32[16,32], index: 3, kind: output, shape index: {}]
  %s4 = sld [smem:[#allocation0]]
  $region30: #{tpu_custom_call.1} parent=0
    _
  %s6 = ssub.s32 1, %s4
  %s7 = scalar_select 0, %s6, %s4
  $region1: #{tpu_custom_call.1} parent=0
    #allocation2 [shape = 'u8[8192]{0}', space=vmem, size = 0x2000, scoped, tag = 'input window, operand 0, single buffered']
    #allocation3 [shape = 's32[1]{0}', space=sflag, size = 0x4, scoped, tag = 'scoped memory for tpu_custom_call.1']
    #allocation4 [shape = 's32[1]{0}', space=sflag, size = 0x4, scoped, tag = 'scoped memory for tpu_custom_call.1']
    #allocation5 [shape = 'u8[16384]{0}', space=vmem, size = 0x4000, scoped, tag = 'input window, operand 1, single buffered']
    #allocation6 [shape = 's32[1]{0}', space=sflag, size = 0x4, scoped, tag = 'scoped memory for tpu_custom_call.1']
    #allocation7 [shape = 'u8[8192]{0}', space=vmem, size = 0x2000, scoped, tag = 'output window, operand 0, single buffered']
    %8 = vsyncpa [#allocation3], 0
    %9 = vsyncpa [#allocation6], 0
    %10 = vsyncpa [#allocation4], 0
    // Predicated region
    $region2: #{tpu_custom_call.1} parent=1 // pred_check
      _
    $region3: #{tpu_custom_call.1} parent=1 // pred_check_branch
      %12 = sbr.rel (0) target = $region5
    $region4: #{tpu_custom_call.1} parent=1 // pred_region
      %s14 = ssub.s32 256, 256
      %15 = vsyncadd [#allocation3], %s14
      %s16 = sshll.u32 [#allocation2], 4
      %s17 = int_to_ptr.vmem [resolvable:$true] %s16
      %22 = dma.hbm_to_vmem [thread:$0]  %s0, 256, %s17, [#allocation3], 128, 128, 8
    $region5: #{tpu_custom_call.1} parent=1 // pred_fallthru
      _
    // Predicated region
    $region6: #{tpu_custom_call.1} parent=1 // pred_check
      _
    $region7: #{tpu_custom_call.1} parent=1 // pred_check_branch
      %24 = sbr.rel (0) target = $region9
    $region8: #{tpu_custom_call.1} parent=1 // pred_region
      %s26 = ssub.s32 512, 512
      %27 = vsyncadd [#allocation6], %s26
      %s28 = sshll.u32 [#allocation5], 4
      %s29 = int_to_ptr.vmem [resolvable:$true] %s28
      %34 = dma.hbm_to_vmem [thread:$0]  %s1, 512, %s29, [#allocation6], 128, 128, 8
    $region9: #{tpu_custom_call.1} parent=1 // pred_fallthru
      _
    // Predicated region
    $region10: #{tpu_custom_call.1} parent=1 // pred_check
      _
    $region11: #{tpu_custom_call.1} parent=1 // pred_check_branch
      %36 = sbr.rel (0) target = $region13
    $region12: #{tpu_custom_call.1} parent=1 // pred_region
      _
    $region13: #{tpu_custom_call.1} parent=1 // pred_fallthru
      _
    // Predicated region
    $region14: #{tpu_custom_call.1} parent=1 // pred_check
      _
    $region15: #{tpu_custom_call.1} parent=1 // pred_check_branch
      %38 = sbr.rel (0) target = $region17
    $region16: #{tpu_custom_call.1} parent=1 // pred_region
      %39 = dma.done [#allocation3], 256
    $region17: #{tpu_custom_call.1} parent=1 // pred_fallthru
      _
    // Predicated region
    $region18: #{tpu_custom_call.1} parent=1 // pred_check
      _
    $region19: #{tpu_custom_call.1} parent=1 // pred_check_branch
      %41 = sbr.rel (0) target = $region21
    $region20: #{tpu_custom_call.1} parent=1 // pred_region
      %42 = dma.done [#allocation6], 512
    $region21: #{tpu_custom_call.1} parent=1 // pred_fallthru
      _
    %v43 = vld [vmem:[#allocation2] sm:$0xff]
    %v44 = vld [vmem:[#allocation2 + $0x8] sm:$0xff]
    %v45 = vld [vmem:[#allocation5] sm:$0xff]
    %v46 = vld [vmem:[#allocation5 + $0x8] sm:$0xff]
    %v47 = vld [vmem:[#allocation5 + $0x10] sm:$0xff]
    %v48 = vld [vmem:[#allocation5 + $0x18] sm:$0xff]
    %v49 = vld [vmem:[%s2] sm:$0x1]
    %v51 = vlaneseq
    %v52 = vshrl.u32 %v51, 7
    %v53 = vsub.s32 0, %v52
    %v54 = vrot.slane %v49, %v53
    %vm56 = vcmask 261120
    %v58 = vsel %vm56, %v43, 0
    %v61 = vsel %vm56, %v44, 0
    %v64 = vsel %vm56, %v45, 0
    %v67 = vsel %vm56, %v46, 0
    %v70 = vsel %vm56, %v47, 0
    %v73 = vsel %vm56, %v48, 0
    %75 = vmatprep.subr.mxu0 0.0
    %76 = vmatpush1.xpose.msra.mxu0 0.0
    %77 = vmatprep.subr.mxu0 0.0
    %78 = vmatpush1.xpose.msra.mxu0 0.0
    %79 = vmatprep.subr.mxu0 0.0
    %80 = vmatpush1.xpose.msra.mxu0 0.0
    %81 = vmatprep.subr.mxu0 0.0
    %82 = vmatpush1.xpose.msra.mxu0 0.0
    %83 = vmatprep.subr.mxu0 0.0
    %84 = vmatpush1.xpose.msra.mxu0 0.0
    %85 = vmatprep.subr.mxu0 0.0
    %86 = vmatpush1.xpose.msra.mxu0 0.0
    %87 = vmatprep.subr.mxu0 0.0
    %88 = vmatpush1.xpose.msra.mxu0 0.0
    %89 = vmatprep.subr.mxu0 0.0
    %90 = vmatpush1.xpose.msra.mxu0 0.0
    %91 = vmatprep.subr.mxu0 0.0
    %92 = vmatpush1.xpose.msra.mxu0 0.0
    %93 = vmatprep.subr.mxu0 0.0
    %94 = vmatpush1.xpose.msra.mxu0 0.0
    %95 = vmatprep.subr.mxu0 0.0
    %96 = vmatpush1.xpose.msra.mxu0 0.0
    %97 = vmatprep.subr.mxu0 0.0
    %98 = vmatpush1.xpose.msra.mxu0 0.0
    %99 = vmatprep.subr.mxu0 0.0
    %100 = vmatpush1.xpose.msra.mxu0 %v73
    %101 = vmatprep.subr.mxu0 0.0
    %102 = vmatpush1.xpose.msra.mxu0 %v70
    %103 = vmatprep.subr.mxu0 0.0
    %104 = vmatpush1.xpose.msra.mxu0 %v67
    %105 = vmatprep.subr.mxu0 0.0
    %106 = vmatpush1.xpose.msra.mxu0 %v64
    %107 = vmatprep.subr.mxu0 0.0
    %108 = vmatpush2.xpose.msra.mxu0 0.0
    %109 = vmatprep.subr.mxu0 0.0
    %110 = vmatpush2.xpose.msra.mxu0 0.0
    %111 = vmatprep.subr.mxu0 0.0
    %112 = vmatpush2.xpose.msra.mxu0 0.0
    %113 = vmatprep.subr.mxu0 0.0
    %114 = vmatpush2.xpose.msra.mxu0 0.0
    %115 = vmatprep.subr.mxu0 0.0
    %116 = vmatpush2.xpose.msra.mxu0 0.0
    %117 = vmatprep.subr.mxu0 0.0
    %118 = vmatpush2.xpose.msra.mxu0 0.0
    %119 = vmatprep.subr.mxu0 0.0
    %120 = vmatpush2.xpose.msra.mxu0 0.0
    %121 = vmatprep.subr.mxu0 0.0
    %122 = vmatpush2.xpose.msra.mxu0 0.0
    %123 = vmatprep.subr.mxu0 0.0
    %124 = vmatpush2.xpose.msra.mxu0 0.0
    %125 = vmatprep.subr.mxu0 0.0
    %126 = vmatpush2.xpose.msra.mxu0 0.0
    %127 = vmatprep.subr.mxu0 0.0
    %128 = vmatpush2.xpose.msra.mxu0 0.0
    %129 = vmatprep.subr.mxu0 0.0
    %130 = vmatpush2.xpose.msra.mxu0 0.0
    %131 = vmatprep.subr.mxu0 0.0
    %132 = vmatpush2.xpose.msra.mxu0 0.0
    %133 = vmatprep.subr.mxu0 0.0
    %134 = vmatpush2.xpose.msra.mxu0 0.0
    %135 = vmatprep.subr.mxu0 0.0
    %136 = vmatpush2.xpose.msra.mxu0 0.0
    %137 = vmatprep.subr.mxu0 0.0
    %138 = vmatpush2.xpose.msra.mxu0 0.0
    %139 = vmatprep.mubr.f32.mxu0 0.0
    %140 = vmatmul.mubr.f32.gmra.mxu0 %v58
    %v141 = vpop.f32.mrf.mxu0
    %v142 = vadd.f32 %v54, %v141
    %v143 = vpop.f32.mrf.mxu0
    %144 = vmatprep.mubr.f32.mxu0 0.0
    %145 = vmatmul.mubr.f32.gmra.mxu0 %v61
    %v146 = vpop.f32.mrf.mxu0
    %v147 = vadd.f32 %v54, %v146
    %v148 = vpop.f32.mrf.mxu0
    %149 = vdwg.mxu0
    %150 = vst.msk [vmem:[#allocation7] sm:$0xff] %vm56, %v142
    %151 = vst.msk [vmem:[#allocation7 + $0x8] sm:$0xff] %vm56, %v147
    // Predicated region
    $region22: #{tpu_custom_call.1} parent=1 // pred_check
      _
    $region23: #{tpu_custom_call.1} parent=1 // pred_check_branch
      %153 = sbr.rel (0) target = $region25
    $region24: #{tpu_custom_call.1} parent=1 // pred_region
      %s155 = ssub.s32 256, 256
      %156 = vsyncadd [#allocation4], %s155
      %s157 = sshll.u32 [#allocation7], 4
      %s158 = int_to_ptr.vmem [resolvable:$true] %s157
      %163 = dma.vmem_to_hbm [thread:$0]  %s158, 256, %s3, [#allocation4], 128, 128, 8
    $region25: #{tpu_custom_call.1} parent=1 // pred_fallthru
      _
    // Predicated region
    $region26: #{tpu_custom_call.1} parent=1 // pred_check
      _
    $region27: #{tpu_custom_call.1} parent=1 // pred_check_branch
      %165 = sbr.rel (0) target = $region29
    $region28: #{tpu_custom_call.1} parent=1 // pred_region
      %166 = dma.done [#allocation4], 256
    $region29: #{tpu_custom_call.1} parent=1 // pred_fallthru
      _
    %167 = vsyncpa [#allocation3], 1
    %168 = vsyncpa [#allocation6], 1
    %169 = vsyncpa [#allocation4], 1

</llo_original>
